<compile_context>
chip_gen: v5e
topology: v5e:2x2
jax: 0.10.0
libtpu: 0.0.40
codegen_flags: <defaults>
</compile_context>

<pallas_src>
import jax
import jax.numpy as jnp
from jax.experimental import pallas as pl
from jax.experimental.pallas import tpu as pltpu

LANE = 128


def _round_up(n, m):
    return ((n + m - 1) // m) * m


def _ae_kernel(x_ref,
               w1, b1,   # encoder: Linear(input_dim, 64) + ReLU
               w2, b2,   # encoder: Linear(64, 16) + ReLU
               w3, b3,   # decoder: Linear(16, 16) + ReLU
               w4, b4,   # decoder: Linear(16, 64) + ReLU
               w5, b5,   # output_layer: Linear(64, output_dim)
               o_ref):
    """Fused forward for one (tile_b, 128)-padded batch tile."""
    h = x_ref[...].astype(jnp.float32)

    def lin(h, w_ref, b_ref, relu=True):
        # bf16 MXU inputs, f32 accumulation; bias-add / ReLU in f32 on the VPU.
        y = jnp.dot(h.astype(w_ref.dtype), w_ref[...],
                    preferred_element_type=jnp.float32)
        y = y + b_ref[...].astype(jnp.float32)
        return jnp.maximum(y, 0.0) if relu else y

    h = lin(h, w1, b1)
    h = lin(h, w2, b2)
    h = lin(h, w3, b3)
    h = lin(h, w4, b4)
    y = lin(h, w5, b5, relu=False)
    o_ref[...] = y.astype(o_ref.dtype)


def ae_forward(x, params, *, tile_b=128, param_dtype=jnp.bfloat16):
    """x: (B, input_dim) float32. params: list of 5 (W, b) with W as (in, out)."""
    B, D_in = x.shape
    D_out = params[-1][0].shape[1]

    # --- host-side zero-padding of every layer to lane-dense (multiple-of-128) dims.
    padded = []
    for (W, b) in params:
        din, dout = W.shape
        pdin, pdout = _round_up(din, LANE), _round_up(dout, LANE)
        Wp = jnp.zeros((pdin, pdout), jnp.float32).at[:din, :dout].set(W)
        Wp = Wp.astype(param_dtype)
        bp = jnp.zeros((1, pdout), jnp.float32).at[0, :dout].set(b)
        padded.append((Wp, bp))
    D_in_p = padded[0][0].shape[0]
    D_out_p = padded[-1][0].shape[1]

    # --- batch padding (no hard assert): pad B up to a multiple of tile_b.
    tile_b = max(8, min(int(tile_b), _round_up(B, 8)))
    tile_b = _round_up(tile_b, 8)
    Bp = _round_up(B, tile_b)

    x_p = jnp.zeros((Bp, D_in_p), jnp.float32).at[:B, :D_in].set(x)

    flat_args = []
    in_specs = [pl.BlockSpec((tile_b, D_in_p), lambda i: (i, 0))]
    for (Wp, bp) in padded:
        flat_args.extend([Wp, bp])
        # Constant index_map: blocks are resident, never re-fetched across steps.
        in_specs.append(pl.BlockSpec(Wp.shape, lambda i: (0, 0)))
        in_specs.append(pl.BlockSpec(bp.shape, lambda i: (0, 0)))
    out_spec = pl.BlockSpec((tile_b, D_out_p), lambda i: (i, 0))

    flops = 2 * Bp * sum(Wp.shape[0] * Wp.shape[1] for (Wp, _) in padded)
    bytes_accessed = (
        x_p.size * 4 + Bp * D_out_p * 4
        + sum(Wp.size * Wp.dtype.itemsize + bp.size * 4 for (Wp, bp) in padded)
    )

    out_p = pl.pallas_call(
        _ae_kernel,
        out_shape=jax.ShapeDtypeStruct((Bp, D_out_p), x.dtype),
        grid_spec=pltpu.PrefetchScalarGridSpec(
            num_scalar_prefetch=0,
            grid=(Bp // tile_b,),
            in_specs=in_specs,
            out_specs=out_spec,
        ),
        compiler_params=pltpu.CompilerParams(
            dimension_semantics=("parallel",),
        ),
        cost_estimate=pl.CostEstimate(
            flops=int(flops), transcendentals=0, bytes_accessed=int(bytes_accessed)),
    )(x_p, *flat_args)

    return out_p[:B, :D_out]


def init_params(key, input_dim, output_dim):
    """Deterministic synthetic params matching ShallowAEModel layer shapes.

    Layer sizes (in -> out):
      encoder: input_dim->64, 64->16
      decoder: 16->16, 16->64
      output_layer: 64->output_dim
    """
    dims = [
        (input_dim, 64), (64, 16),       # encoder
        (16, 16), (16, 64),              # decoder
        (64, output_dim),                # output layer
    ]
    params = []
    for (din, dout) in dims:
        key, kw, kb = jax.random.split(key, 3)
        bound = 1.0 / jnp.sqrt(din)      # PyTorch default uniform bound
        W = jax.random.uniform(kw, (din, dout), jnp.float32, -bound, bound)
        b = jax.random.uniform(kb, (dout,), jnp.float32, -bound, bound)
        params.append((W, b))
    return params


def ae_forward_ref(x, params, param_dtype=jnp.bfloat16):
    """Plain-JAX reference with matching bf16-MXU / f32-accumulate semantics."""
    h = x
    for i, (W, b) in enumerate(params):
        y = jnp.dot(h.astype(param_dtype), W.astype(param_dtype),
                    preferred_element_type=jnp.float32) + b
        h = jnp.maximum(y, 0.0) if i < len(params) - 1 else y
    return h


if __name__ == "__main__":
    # Small shapes consistent with the module (input_dim == output_dim).
    INPUT_DIM = 128
    OUTPUT_DIM = 128
    BATCH = 256
    TILE_B = 128   # 2 grid steps -> both v7x TensorCores get work

    key = jax.random.PRNGKey(0)
    key, kx = jax.random.split(key)
    x = jax.random.normal(kx, (BATCH, INPUT_DIM), jnp.float32)
    params = init_params(key, INPUT_DIM, OUTPUT_DIM)

    out = ae_forward(x, params, tile_b=TILE_B)
    out = jax.block_until_ready(out)

    ref = ae_forward_ref(x, params)
    assert out.shape == (BATCH, OUTPUT_DIM)
    assert jnp.allclose(out, ref, atol=1e-3, rtol=1e-3), "mismatch vs reference"

    # TODO(synk): get_l1_regularization-style training losses are not part of the
    # forward pass; in plain JAX they are trivially jnp.sum(jnp.abs(...)).
    print("KERNEL_OK")
</pallas_src>

<mosaic_0001>
module attributes {stable_mosaic.version = 11 : i64} {
  func.func @_ae_kernel(%arg0: i32, %arg1: memref<128x128xf32, #tpu.memory_space<vmem>>, %arg2: memref<128x128xbf16, #tpu.memory_space<vmem>>, %arg3: memref<1x128xf32, #tpu.memory_space<vmem>>, %arg4: memref<128x128xbf16, #tpu.memory_space<vmem>>, %arg5: memref<1x128xf32, #tpu.memory_space<vmem>>, %arg6: memref<128x128xbf16, #tpu.memory_space<vmem>>, %arg7: memref<1x128xf32, #tpu.memory_space<vmem>>, %arg8: memref<128x128xbf16, #tpu.memory_space<vmem>>, %arg9: memref<1x128xf32, #tpu.memory_space<vmem>>, %arg10: memref<128x128xbf16, #tpu.memory_space<vmem>>, %arg11: memref<1x128xf32, #tpu.memory_space<vmem>>, %arg12: memref<128x128xf32, #tpu.memory_space<vmem>>) attributes {dimension_semantics = [#tpu.dimension_semantics<parallel>], iteration_bounds = array<i64: 2>, scalar_prefetch = 0 : i64, scratch_operands = 0 : i64, tpu.core_type = #tpu.core_type<tc>, window_params = [{transform_indices = @transform_0, window_bounds = array<i64: 128, 128>}, {pipeline_mode = #tpu.pipeline_mode<synchronous>, transform_indices = @transform_1, window_bounds = array<i64: 128, 128>}, {pipeline_mode = #tpu.pipeline_mode<synchronous>, transform_indices = @transform_2, window_bounds = array<i64: 1, 128>}, {pipeline_mode = #tpu.pipeline_mode<synchronous>, transform_indices = @transform_3, window_bounds = array<i64: 128, 128>}, {pipeline_mode = #tpu.pipeline_mode<synchronous>, transform_indices = @transform_4, window_bounds = array<i64: 1, 128>}, {pipeline_mode = #tpu.pipeline_mode<synchronous>, transform_indices = @transform_5, window_bounds = array<i64: 128, 128>}, {pipeline_mode = #tpu.pipeline_mode<synchronous>, transform_indices = @transform_6, window_bounds = array<i64: 1, 128>}, {pipeline_mode = #tpu.pipeline_mode<synchronous>, transform_indices = @transform_7, window_bounds = array<i64: 128, 128>}, {pipeline_mode = #tpu.pipeline_mode<synchronous>, transform_indices = @transform_8, window_bounds = array<i64: 1, 128>}, {pipeline_mode = #tpu.pipeline_mode<synchronous>, transform_indices = @transform_9, window_bounds = array<i64: 128, 128>}, {pipeline_mode = #tpu.pipeline_mode<synchronous>, transform_indices = @transform_10, window_bounds = array<i64: 1, 128>}, {transform_indices = @transform_11, window_bounds = array<i64: 128, 128>}]} {
    %c0 = arith.constant 0 : index
    %c0_0 = arith.constant 0 : index
    %0 = vector.load %arg1[%c0, %c0_0] : memref<128x128xf32, #tpu.memory_space<vmem>>, vector<128x128xf32>
    %1 = arith.truncf %0 : vector<128x128xf32> to vector<128x128xbf16>
    %c0_1 = arith.constant 0 : index
    %c0_2 = arith.constant 0 : index
    %2 = vector.load %arg2[%c0_1, %c0_2] : memref<128x128xbf16, #tpu.memory_space<vmem>>, vector<128x128xbf16>
    %cst = arith.constant dense<0.000000e+00> : vector<128x128xf32>
    %3 = tpu.matmul %1, %2, %cst {dimension_numbers = #tpu.dot_dimension_numbers<[1], [0], [0], [1], [0, 0, 1, 1], [], []>} : vector<128x128xbf16>, vector<128x128xbf16>, vector<128x128xf32> -> vector<128x128xf32>
    %c0_3 = arith.constant 0 : index
    %c0_4 = arith.constant 0 : index
    %4 = vector.load %arg3[%c0_3, %c0_4] : memref<1x128xf32, #tpu.memory_space<vmem>>, vector<1x128xf32>
    %5 = vector.broadcast %4 : vector<1x128xf32> to vector<128x128xf32>
    %6 = arith.addf %3, %5 : vector<128x128xf32>
    %cst_5 = arith.constant 0.000000e+00 : f32
    %7 = vector.broadcast %cst_5 : f32 to vector<128x128xf32>
    %8 = arith.maximumf %6, %7 : vector<128x128xf32>
    %9 = arith.truncf %8 : vector<128x128xf32> to vector<128x128xbf16>
    %c0_6 = arith.constant 0 : index
    %c0_7 = arith.constant 0 : index
    %10 = vector.load %arg4[%c0_6, %c0_7] : memref<128x128xbf16, #tpu.memory_space<vmem>>, vector<128x128xbf16>
    %cst_8 = arith.constant dense<0.000000e+00> : vector<128x128xf32>
    %11 = tpu.matmul %9, %10, %cst_8 {dimension_numbers = #tpu.dot_dimension_numbers<[1], [0], [0], [1], [0, 0, 1, 1], [], []>} : vector<128x128xbf16>, vector<128x128xbf16>, vector<128x128xf32> -> vector<128x128xf32>
    %c0_9 = arith.constant 0 : index
    %c0_10 = arith.constant 0 : index
    %12 = vector.load %arg5[%c0_9, %c0_10] : memref<1x128xf32, #tpu.memory_space<vmem>>, vector<1x128xf32>
    %13 = vector.broadcast %12 : vector<1x128xf32> to vector<128x128xf32>
    %14 = arith.addf %11, %13 : vector<128x128xf32>
    %cst_11 = arith.constant 0.000000e+00 : f32
    %15 = vector.broadcast %cst_11 : f32 to vector<128x128xf32>
    %16 = arith.maximumf %14, %15 : vector<128x128xf32>
    %17 = arith.truncf %16 : vector<128x128xf32> to vector<128x128xbf16>
    %c0_12 = arith.constant 0 : index
    %c0_13 = arith.constant 0 : index
    %18 = vector.load %arg6[%c0_12, %c0_13] : memref<128x128xbf16, #tpu.memory_space<vmem>>, vector<128x128xbf16>
    %cst_14 = arith.constant dense<0.000000e+00> : vector<128x128xf32>
    %19 = tpu.matmul %17, %18, %cst_14 {dimension_numbers = #tpu.dot_dimension_numbers<[1], [0], [0], [1], [0, 0, 1, 1], [], []>} : vector<128x128xbf16>, vector<128x128xbf16>, vector<128x128xf32> -> vector<128x128xf32>
    %c0_15 = arith.constant 0 : index
    %c0_16 = arith.constant 0 : index
    %20 = vector.load %arg7[%c0_15, %c0_16] : memref<1x128xf32, #tpu.memory_space<vmem>>, vector<1x128xf32>
    %21 = vector.broadcast %20 : vector<1x128xf32> to vector<128x128xf32>
    %22 = arith.addf %19, %21 : vector<128x128xf32>
    %cst_17 = arith.constant 0.000000e+00 : f32
    %23 = vector.broadcast %cst_17 : f32 to vector<128x128xf32>
    %24 = arith.maximumf %22, %23 : vector<128x128xf32>
    %25 = arith.truncf %24 : vector<128x128xf32> to vector<128x128xbf16>
    %c0_18 = arith.constant 0 : index
    %c0_19 = arith.constant 0 : index
    %26 = vector.load %arg8[%c0_18, %c0_19] : memref<128x128xbf16, #tpu.memory_space<vmem>>, vector<128x128xbf16>
    %cst_20 = arith.constant dense<0.000000e+00> : vector<128x128xf32>
    %27 = tpu.matmul %25, %26, %cst_20 {dimension_numbers = #tpu.dot_dimension_numbers<[1], [0], [0], [1], [0, 0, 1, 1], [], []>} : vector<128x128xbf16>, vector<128x128xbf16>, vector<128x128xf32> -> vector<128x128xf32>
    %c0_21 = arith.constant 0 : index
    %c0_22 = arith.constant 0 : index
    %28 = vector.load %arg9[%c0_21, %c0_22] : memref<1x128xf32, #tpu.memory_space<vmem>>, vector<1x128xf32>
    %29 = vector.broadcast %28 : vector<1x128xf32> to vector<128x128xf32>
    %30 = arith.addf %27, %29 : vector<128x128xf32>
    %cst_23 = arith.constant 0.000000e+00 : f32
    %31 = vector.broadcast %cst_23 : f32 to vector<128x128xf32>
    %32 = arith.maximumf %30, %31 : vector<128x128xf32>
    %33 = arith.truncf %32 : vector<128x128xf32> to vector<128x128xbf16>
    %c0_24 = arith.constant 0 : index
    %c0_25 = arith.constant 0 : index
    %34 = vector.load %arg10[%c0_24, %c0_25] : memref<128x128xbf16, #tpu.memory_space<vmem>>, vector<128x128xbf16>
    %cst_26 = arith.constant dense<0.000000e+00> : vector<128x128xf32>
    %35 = tpu.matmul %33, %34, %cst_26 {dimension_numbers = #tpu.dot_dimension_numbers<[1], [0], [0], [1], [0, 0, 1, 1], [], []>} : vector<128x128xbf16>, vector<128x128xbf16>, vector<128x128xf32> -> vector<128x128xf32>
    %c0_27 = arith.constant 0 : index
    %c0_28 = arith.constant 0 : index
    %36 = vector.load %arg11[%c0_27, %c0_28] : memref<1x128xf32, #tpu.memory_space<vmem>>, vector<1x128xf32>
    %37 = vector.broadcast %36 : vector<1x128xf32> to vector<128x128xf32>
    %38 = arith.addf %35, %37 : vector<128x128xf32>
    %c0_29 = arith.constant 0 : index
    %c0_30 = arith.constant 0 : index
    %39 = vector.load %arg12[%c0_29, %c0_30] : memref<128x128xf32, #tpu.memory_space<vmem>>, vector<128x128xf32>
    tpu.vector_store %arg12[%c0_29, %c0_30], %38 {strides = array<i32>} : memref<128x128xf32, #tpu.memory_space<vmem>>, vector<128x128xf32>,
    return
  }
  func.func @transform_0(%arg0: i32) -> (i32, i32) {
    %c0_i32 = arith.constant 0 : i32
    %c0_i32_0 = arith.constant 0 : i32
    return %arg0, %c0_i32 : i32, i32
  }
  func.func @transform_1(%arg0: i32) -> (i32, i32) {
    %c0_i32 = arith.constant 0 : i32
    %c0_i32_0 = arith.constant 0 : i32
    %c0_i32_1 = arith.constant 0 : i32
    return %c0_i32, %c0_i32_0 : i32, i32
  }
  func.func @transform_2(%arg0: i32) -> (i32, i32) {
    %c0_i32 = arith.constant 0 : i32
    %c0_i32_0 = arith.constant 0 : i32
    %c0_i32_1 = arith.constant 0 : i32
    return %c0_i32, %c0_i32_0 : i32, i32
  }
  func.func @transform_3(%arg0: i32) -> (i32, i32) {
    %c0_i32 = arith.constant 0 : i32
    %c0_i32_0 = arith.constant 0 : i32
    %c0_i32_1 = arith.constant 0 : i32
    return %c0_i32, %c0_i32_0 : i32, i32
  }
  func.func @transform_4(%arg0: i32) -> (i32, i32) {
    %c0_i32 = arith.constant 0 : i32
    %c0_i32_0 = arith.constant 0 : i32
    %c0_i32_1 = arith.constant 0 : i32
    return %c0_i32, %c0_i32_0 : i32, i32
  }
  func.func @transform_5(%arg0: i32) -> (i32, i32) {
    %c0_i32 = arith.constant 0 : i32
    %c0_i32_0 = arith.constant 0 : i32
    %c0_i32_1 = arith.constant 0 : i32
    return %c0_i32, %c0_i32_0 : i32, i32
  }
  func.func @transform_6(%arg0: i32) -> (i32, i32) {
    %c0_i32 = arith.constant 0 : i32
    %c0_i32_0 = arith.constant 0 : i32
    %c0_i32_1 = arith.constant 0 : i32
    return %c0_i32, %c0_i32_0 : i32, i32
  }
  func.func @transform_7(%arg0: i32) -> (i32, i32) {
    %c0_i32 = arith.constant 0 : i32
    %c0_i32_0 = arith.constant 0 : i32
    %c0_i32_1 = arith.constant 0 : i32
    return %c0_i32, %c0_i32_0 : i32, i32
  }
  func.func @transform_8(%arg0: i32) -> (i32, i32) {
    %c0_i32 = arith.constant 0 : i32
    %c0_i32_0 = arith.constant 0 : i32
    %c0_i32_1 = arith.constant 0 : i32
    return %c0_i32, %c0_i32_0 : i32, i32
  }
  func.func @transform_9(%arg0: i32) -> (i32, i32) {
    %c0_i32 = arith.constant 0 : i32
    %c0_i32_0 = arith.constant 0 : i32
    %c0_i32_1 = arith.constant 0 : i32
    return %c0_i32, %c0_i32_0 : i32, i32
  }
  func.func @transform_10(%arg0: i32) -> (i32, i32) {
    %c0_i32 = arith.constant 0 : i32
    %c0_i32_0 = arith.constant 0 : i32
    %c0_i32_1 = arith.constant 0 : i32
    return %c0_i32, %c0_i32_0 : i32, i32
  }
  func.func @transform_11(%arg0: i32) -> (i32, i32) {
    %c0_i32 = arith.constant 0 : i32
    %c0_i32_0 = arith.constant 0 : i32
    return %arg0, %c0_i32 : i32, i32
  }
}

</mosaic_0001>

<llo_original>
// kernel: tpu_custom_call.1
$region0: #{tpu_custom_call.1}
  #allocation0 [shape = 'u32[]', space=smem, size = 0x4, offset = 0x4, fixed_abs, tag = 'smem constant byte address 0x4 - core index']
  #allocation1 [shape = 'u32[72,128]{1,0:T(1,128)}', space=vmem, size = 0x9000, scoped, tag = 'internal scratch']
  %s0 = inlined_call_operand.hbm [shape: f32[256,128], index: 0, kind: input, shape index: {}]
  %s1 = inlined_call_operand.hbm [shape: bf16[128,128], index: 1, kind: input, shape index: {}]
  %s2 = inlined_call_operand.vmem [shape: f32[1,128], index: 2, kind: input, shape index: {}]
  %s3 = inlined_call_operand.hbm [shape: bf16[128,128], index: 3, kind: input, shape index: {}]
  %s4 = inlined_call_operand.vmem [shape: f32[1,128], index: 4, kind: input, shape index: {}]
  %s5 = inlined_call_operand.hbm [shape: bf16[128,128], index: 5, kind: input, shape index: {}]
  %s6 = inlined_call_operand.vmem [shape: f32[1,128], index: 6, kind: input, shape index: {}]
  %s7 = inlined_call_operand.hbm [shape: bf16[128,128], index: 7, kind: input, shape index: {}]
  %s8 = inlined_call_operand.vmem [shape: f32[1,128], index: 8, kind: input, shape index: {}]
  %s9 = inlined_call_operand.hbm [shape: bf16[128,128], index: 9, kind: input, shape index: {}]
  %s10 = inlined_call_operand.vmem [shape: f32[1,128], index: 10, kind: input, shape index: {}]
  %s11 = inlined_call_operand.hbm [shape: f32[256,128], index: 11, kind: output, shape index: {}]
  %s12 = sld [smem:[#allocation0]]
  $region101: #{tpu_custom_call.1} parent=0
    _
  %s14 = ssub.s32 1, %s12
  %s15 = scalar_select 0, %s14, %s12
  $region1: #{tpu_custom_call.1} parent=0
    #allocation2 [shape = 'u8[131072]{0}', space=vmem, size = 0x20000, scoped, tag = 'input window, operand 0']
    #allocation3 [shape = 's32[2]{0}', space=sflag, size = 0x8, scoped, tag = 'scoped memory for tpu_custom_call.1']
    #allocation4 [shape = 's32[2]{0}', space=sflag, size = 0x8, scoped, tag = 'scoped memory for tpu_custom_call.1']
    #allocation5 [shape = 'u8[32768]{0}', space=vmem, size = 0x8000, scoped, tag = 'input window, operand 1, single buffered']
    #allocation6 [shape = 's32[1]{0}', space=sflag, size = 0x4, scoped, tag = 'scoped memory for tpu_custom_call.1']
    #allocation7 [shape = 'u8[32768]{0}', space=vmem, size = 0x8000, scoped, tag = 'input window, operand 3, single buffered']
    #allocation8 [shape = 'u8[32768]{0}', space=vmem, size = 0x8000, scoped, tag = 'input window, operand 5, single buffered']
    #allocation9 [shape = 's32[1]{0}', space=sflag, size = 0x4, scoped, tag = 'scoped memory for tpu_custom_call.1']
    #allocation10 [shape = 'u8[32768]{0}', space=vmem, size = 0x8000, scoped, tag = 'input window, operand 7, single buffered']
    #allocation11 [shape = 'u8[32768]{0}', space=vmem, size = 0x8000, scoped, tag = 'input window, operand 9, single buffered']
    #allocation12 [shape = 's32[1]{0}', space=sflag, size = 0x4, scoped, tag = 'scoped memory for tpu_custom_call.1']
    #allocation13 [shape = 'u8[131072]{0}', space=vmem, size = 0x20000, scoped, tag = 'output window, operand 0']
    %16 = vsyncpa [#allocation3], 0
    %s17 = scalar_lea.sflag [#allocation3], 1
    %18 = vsyncpa %s17, 0
    %19 = vsyncpa [#allocation6], 0
    %20 = vsyncpa [#allocation9], 0
    %21 = vsyncpa [#allocation12], 0
    %22 = vsyncpa [#allocation4], 0
    %s23 = scalar_lea.sflag [#allocation4], 1
    %24 = vsyncpa %s23, 0
    loop: start=0, step=1, limit=4
    $region2: #{tpu_custom_call.1} parent=1 // loop_pre_header
      _
    $region3: #{tpu_custom_call.1} parent=1 // loop_header
      %s26 = sphi 0, %s30
      %p27 = scmp.ge.s32.totalorder %s26, 4
      %s36 = sphi 0, %s38
      %s39 = sphi 0, %s36
      %s40 = sphi 0, %s39
      %s56 = sphi 0, %s40
      %s60 = sphi 0, %s60
      %s62 = sphi 0, %s60
      %s63 = sphi 0, %s62
      %s77 = sphi 0, %s63
      %s81 = sphi 0, %s81
      %s83 = sphi 0, %s81
      %s84 = sphi 0, %s83
      %s98 = sphi 0, %s84
      %s102 = sphi 0, %s102
      %s104 = sphi 0, %s102
      %s105 = sphi 0, %s104
      %s119 = sphi 0, %s105
      %s123 = sphi 0, %s123
      %s125 = sphi 0, %s123
      %s126 = sphi 0, %s125
      %s140 = sphi 0, %s126
      %s144 = sphi 0, %s144
      %s146 = sphi 0, %s144
      %s147 = sphi 0, %s146
      %s161 = sphi 0, %s147
      %s165 = sphi 0, %s165
      %s167 = sphi 0, %s165
      %s168 = sphi 0, %s167
      %s182 = sphi 0, %s168
      %s186 = sphi 0, %s186
      %s188 = sphi 0, %s186
      %s189 = sphi 0, %s188
      %s203 = sphi 0, %s189
      %s207 = sphi 0, %s207
      %s209 = sphi 0, %s207
      %s210 = sphi 0, %s209
      %s224 = sphi 0, %s210
      %s228 = sphi 0, %s228
      %s230 = sphi 0, %s228
      %s231 = sphi 0, %s230
      %s245 = sphi 0, %s231
      %s249 = sphi 0, %s249
      %s251 = sphi 0, %s249
      %s252 = sphi 0, %s251
      %s266 = sphi 0, %s252
      %s272 = sphi 0, %s274
      %s275 = sphi 0, %s272
      %s276 = sphi 0, %s275
      %s292 = sphi 0, %s276
    $region4: #{tpu_custom_call.1} parent=1 // loop_header_branch
      %29 = sbr.rel (%p27) target = $region8
    $region5: #{tpu_custom_call.1} parent=1 // loop_body
      %s31 = ssub.s32 %s26, 1
      %s32 = ssub.s32 %s26, 2
      %s33 = sadd.s32 %s26, 1
      %s34 = ssub.s32 %s26, %s33
      %p35 = scmp.eq.s32.totalorder %s34, 0
      %s37 = sadd.s32 %s36, 1
      %s38 = scalar_select %p35, %s36, %s37
      %p41 = pneg %p35
      %p42 = scmp.eq.s32.totalorder %s26, 1
      %p43 = por %p41, %p42
      %p44 = scmp.ne.s32.totalorder %s36, %s39
      %p45 = scmp.eq.s32.totalorder %s26, 0
      %p46 = por %p44, %p45
      %p47 = scmp.ne.s32.totalorder %s36, %s39
      %p48 = scmp.eq.s32.totalorder %s31, 1
      %p49 = por %p47, %p48
      %p50 = scmp.ne.s32.totalorder %s39, %s40
      %p51 = scmp.eq.s32.totalorder %s31, 0
      %p52 = por %p50, %p51
      %p53 = scmp.ne.s32.totalorder %s39, %s40
      %p54 = scmp.eq.s32.totalorder %s32, 1
      %p55 = por %p53, %p54
      %p57 = scmp.ne.s32.totalorder %s40, %s56
      %p58 = scmp.eq.s32.totalorder %s32, 0
      %p59 = por %p57, %p58
      %s61 = sadd.s32 %s60, 1
      %p64 = scmp.eq.s32.totalorder %s26, 1
      %p65 = scmp.ne.s32.totalorder %s60, %s62
      %p66 = scmp.eq.s32.totalorder %s26, 0
      %p67 = por %p65, %p66
      %p68 = scmp.ne.s32.totalorder %s60, %s62
      %p69 = scmp.eq.s32.totalorder %s31, 1
      %p70 = por %p68, %p69
      %p71 = scmp.ne.s32.totalorder %s62, %s63
      %p72 = scmp.eq.s32.totalorder %s31, 0
      %p73 = por %p71, %p72
      %p74 = scmp.ne.s32.totalorder %s62, %s63
      %p75 = scmp.eq.s32.totalorder %s32, 1
      %p76 = por %p74, %p75
      %p78 = scmp.ne.s32.totalorder %s63, %s77
      %p79 = scmp.eq.s32.totalorder %s32, 0
      %p80 = por %p78, %p79
      %s82 = sadd.s32 %s81, 1
      %p85 = scmp.eq.s32.totalorder %s26, 1
      %p86 = scmp.ne.s32.totalorder %s81, %s83
      %p87 = scmp.eq.s32.totalorder %s26, 0
      %p88 = por %p86, %p87
      %p89 = scmp.ne.s32.totalorder %s81, %s83
      %p90 = scmp.eq.s32.totalorder %s31, 1
      %p91 = por %p89, %p90
      %p92 = scmp.ne.s32.totalorder %s83, %s84
      %p93 = scmp.eq.s32.totalorder %s31, 0
      %p94 = por %p92, %p93
      %p95 = scmp.ne.s32.totalorder %s83, %s84
      %p96 = scmp.eq.s32.totalorder %s32, 1
      %p97 = por %p95, %p96
      %p99 = scmp.ne.s32.totalorder %s84, %s98
      %p100 = scmp.eq.s32.totalorder %s32, 0
      %p101 = por %p99, %p100
      %s103 = sadd.s32 %s102, 1
      %p106 = scmp.eq.s32.totalorder %s26, 1
      %p107 = scmp.ne.s32.totalorder %s102, %s104
      %p108 = scmp.eq.s32.totalorder %s26, 0
      %p109 = por %p107, %p108
      %p110 = scmp.ne.s32.totalorder %s102, %s104
      %p111 = scmp.eq.s32.totalorder %s31, 1
      %p112 = por %p110, %p111
      %p113 = scmp.ne.s32.totalorder %s104, %s105
      %p114 = scmp.eq.s32.totalorder %s31, 0
      %p115 = por %p113, %p114
      %p116 = scmp.ne.s32.totalorder %s104, %s105
      %p117 = scmp.eq.s32.totalorder %s32, 1
      %p118 = por %p116, %p117
      %p120 = scmp.ne.s32.totalorder %s105, %s119
      %p121 = scmp.eq.s32.totalorder %s32, 0
      %p122 = por %p120, %p121
      %s124 = sadd.s32 %s123, 1
      %p127 = scmp.eq.s32.totalorder %s26, 1
      %p128 = scmp.ne.s32.totalorder %s123, %s125
      %p129 = scmp.eq.s32.totalorder %s26, 0
      %p130 = por %p128, %p129
      %p131 = scmp.ne.s32.totalorder %s123, %s125
      %p132 = scmp.eq.s32.totalorder %s31, 1
      %p133 = por %p131, %p132
      %p134 = scmp.ne.s32.totalorder %s125, %s126
      %p135 = scmp.eq.s32.totalorder %s31, 0
      %p136 = por %p134, %p135
      %p137 = scmp.ne.s32.totalorder %s125, %s126
      %p138 = scmp.eq.s32.totalorder %s32, 1
      %p139 = por %p137, %p138
      %p141 = scmp.ne.s32.totalorder %s126, %s140
      %p142 = scmp.eq.s32.totalorder %s32, 0
      %p143 = por %p141, %p142
      %s145 = sadd.s32 %s144, 1
      %p148 = scmp.eq.s32.totalorder %s26, 1
      %p149 = scmp.ne.s32.totalorder %s144, %s146
      %p150 = scmp.eq.s32.totalorder %s26, 0
      %p151 = por %p149, %p150
      %p152 = scmp.ne.s32.totalorder %s144, %s146
      %p153 = scmp.eq.s32.totalorder %s31, 1
      %p154 = por %p152, %p153
      %p155 = scmp.ne.s32.totalorder %s146, %s147
      %p156 = scmp.eq.s32.totalorder %s31, 0
      %p157 = por %p155, %p156
      %p158 = scmp.ne.s32.totalorder %s146, %s147
      %p159 = scmp.eq.s32.totalorder %s32, 1
      %p160 = por %p158, %p159
      %p162 = scmp.ne.s32.totalorder %s147, %s161
      %p163 = scmp.eq.s32.totalorder %s32, 0
      %p164 = por %p162, %p163
      %s166 = sadd.s32 %s165, 1
      %p169 = scmp.eq.s32.totalorder %s26, 1
      %p170 = scmp.ne.s32.totalorder %s165, %s167
      %p171 = scmp.eq.s32.totalorder %s26, 0
      %p172 = por %p170, %p171
      %p173 = scmp.ne.s32.totalorder %s165, %s167
      %p174 = scmp.eq.s32.totalorder %s31, 1
      %p175 = por %p173, %p174
      %p176 = scmp.ne.s32.totalorder %s167, %s168
      %p177 = scmp.eq.s32.totalorder %s31, 0
      %p178 = por %p176, %p177
      %p179 = scmp.ne.s32.totalorder %s167, %s168
      %p180 = scmp.eq.s32.totalorder %s32, 1
      %p181 = por %p179, %p180
      %p183 = scmp.ne.s32.totalorder %s168, %s182
      %p184 = scmp.eq.s32.totalorder %s32, 0
      %p185 = por %p183, %p184
      %s187 = sadd.s32 %s186, 1
      %p190 = scmp.eq.s32.totalorder %s26, 1
      %p191 = scmp.ne.s32.totalorder %s186, %s188
      %p192 = scmp.eq.s32.totalorder %s26, 0
      %p193 = por %p191, %p192
      %p194 = scmp.ne.s32.totalorder %s186, %s188
      %p195 = scmp.eq.s32.totalorder %s31, 1
      %p196 = por %p194, %p195
      %p197 = scmp.ne.s32.totalorder %s188, %s189
      %p198 = scmp.eq.s32.totalorder %s31, 0
      %p199 = por %p197, %p198
      %p200 = scmp.ne.s32.totalorder %s188, %s189
      %p201 = scmp.eq.s32.totalorder %s32, 1
      %p202 = por %p200, %p201
      %p204 = scmp.ne.s32.totalorder %s189, %s203
      %p205 = scmp.eq.s32.totalorder %s32, 0
      %p206 = por %p204, %p205
      %s208 = sadd.s32 %s207, 1
      %p211 = scmp.eq.s32.totalorder %s26, 1
      %p212 = scmp.ne.s32.totalorder %s207, %s209
      %p213 = scmp.eq.s32.totalorder %s26, 0
      %p214 = por %p212, %p213
      %p215 = scmp.ne.s32.totalorder %s207, %s209
      %p216 = scmp.eq.s32.totalorder %s31, 1
      %p217 = por %p215, %p216
      %p218 = scmp.ne.s32.totalorder %s209, %s210
      %p219 = scmp.eq.s32.totalorder %s31, 0
      %p220 = por %p218, %p219
      %p221 = scmp.ne.s32.totalorder %s209, %s210
      %p222 = scmp.eq.s32.totalorder %s32, 1
      %p223 = por %p221, %p222
      %p225 = scmp.ne.s32.totalorder %s210, %s224
      %p226 = scmp.eq.s32.totalorder %s32, 0
      %p227 = por %p225, %p226
      %s229 = sadd.s32 %s228, 1
      %p232 = scmp.eq.s32.totalorder %s26, 1
      %p233 = scmp.ne.s32.totalorder %s228, %s230
      %p234 = scmp.eq.s32.totalorder %s26, 0
      %p235 = por %p233, %p234
      %p236 = scmp.ne.s32.totalorder %s228, %s230
      %p237 = scmp.eq.s32.totalorder %s31, 1
      %p238 = por %p236, %p237
      %p239 = scmp.ne.s32.totalorder %s230, %s231
      %p240 = scmp.eq.s32.totalorder %s31, 0
      %p241 = por %p239, %p240
      %p242 = scmp.ne.s32.totalorder %s230, %s231
      %p243 = scmp.eq.s32.totalorder %s32, 1
      %p244 = por %p242, %p243
      %p246 = scmp.ne.s32.totalorder %s231, %s245
      %p247 = scmp.eq.s32.totalorder %s32, 0
      %p248 = por %p246, %p247
      %s250 = sadd.s32 %s249, 1
      %p253 = scmp.eq.s32.totalorder %s26, 1
      %p254 = scmp.ne.s32.totalorder %s249, %s251
      %p255 = scmp.eq.s32.totalorder %s26, 0
      %p256 = por %p254, %p255
      %p257 = scmp.ne.s32.totalorder %s249, %s251
      %p258 = scmp.eq.s32.totalorder %s31, 1
      %p259 = por %p257, %p258
      %p260 = scmp.ne.s32.totalorder %s251, %s252
      %p261 = scmp.eq.s32.totalorder %s31, 0
      %p262 = por %p260, %p261
      %p263 = scmp.ne.s32.totalorder %s251, %s252
      %p264 = scmp.eq.s32.totalorder %s32, 1
      %p265 = por %p263, %p264
      %p267 = scmp.ne.s32.totalorder %s252, %s266
      %p268 = scmp.eq.s32.totalorder %s32, 0
      %p269 = por %p267, %p268
      %s270 = ssub.s32 %s26, %s33
      %p271 = scmp.eq.s32.totalorder %s270, 0
      %s273 = sadd.s32 %s272, 1
      %s274 = scalar_select %p271, %s272, %s273
      %p277 = pneg %p271
      %p278 = scmp.eq.s32.totalorder %s26, 1
      %p279 = por %p277, %p278
      %p280 = scmp.ne.s32.totalorder %s272, %s275
      %p281 = scmp.eq.s32.totalorder %s26, 0
      %p282 = por %p280, %p281
      %p283 = scmp.ne.s32.totalorder %s272, %s275
      %p284 = scmp.eq.s32.totalorder %s31, 1
      %p285 = por %p283, %p284
      %p286 = scmp.ne.s32.totalorder %s275, %s276
      %p287 = scmp.eq.s32.totalorder %s31, 0
      %p288 = por %p286, %p287
      %p289 = scmp.ne.s32.totalorder %s275, %s276
      %p290 = scmp.eq.s32.totalorder %s32, 1
      %p291 = por %p289, %p290
      %p293 = scmp.ne.s32.totalorder %s276, %s292
      %p294 = scmp.eq.s32.totalorder %s32, 0
      %p295 = por %p293, %p294
      %p296 = scmp.le.s32.totalorder 1, %s26
      %p297 = scmp.lt.s32.totalorder %s26, 3
      %p298 = pnand %p296, %p297
      %p299 = pneg %p298
      // Predicated region
      $region9: #{tpu_custom_call.1} parent=5 // pred_check
        _
      $region10: #{tpu_custom_call.1} parent=5 // pred_check_branch
        %301 = sbr.rel (%p298) target = $region12
      $region11: #{tpu_custom_call.1} parent=5 // pred_region
        %s302 = ssub.s32 %s26, 1
        // Predicated region
        $region13: #{tpu_custom_call.1} parent=11 // pred_check
          %p303 = pneg %p73
        $region14: #{tpu_custom_call.1} parent=11 // pred_check_branch
          %305 = sbr.rel (%p303) target = $region16
        $region15: #{tpu_custom_call.1} parent=11 // pred_region
          %307 = vsyncadd [#allocation6], 0
          %s308 = sshll.u32 %s1, 4
          %s309 = int_to_ptr.hbm [resolvable:$true] %s308
          %s310 = sshll.u32 [#allocation5], 4
          %s311 = int_to_ptr.vmem [resolvable:$true] %s310
          %316 = dma.hbm_to_vmem [thread:$0]  %s309, 1024, %s311, [#allocation6], 64, 64, 4
        $region16: #{tpu_custom_call.1} parent=11 // pred_fallthru
          _
        // Predicated region
        $region17: #{tpu_custom_call.1} parent=11 // pred_check
          %p317 = pneg %p94
        $region18: #{tpu_custom_call.1} parent=11 // pred_check_branch
          %319 = sbr.rel (%p317) target = $region20
        $region19: #{tpu_custom_call.1} parent=11 // pred_region
          _
        $region20: #{tpu_custom_call.1} parent=11 // pred_fallthru
          _
        // Predicated region
        $region21: #{tpu_custom_call.1} parent=11 // pred_check
          %p320 = pneg %p115
        $region22: #{tpu_custom_call.1} parent=11 // pred_check_branch
          %322 = sbr.rel (%p320) target = $region24
        $region23: #{tpu_custom_call.1} parent=11 // pred_region
          %324 = vsyncadd [#allocation6], 0
          %s325 = sshll.u32 %s3, 4
          %s326 = int_to_ptr.hbm [resolvable:$true] %s325
          %s327 = sshll.u32 [#allocation7], 4
          %s328 = int_to_ptr.vmem [resolvable:$true] %s327
          %333 = dma.hbm_to_vmem [thread:$0]  %s326, 1024, %s328, [#allocation6], 64, 64, 4
        $region24: #{tpu_custom_call.1} parent=11 // pred_fallthru
          _
        // Predicated region
        $region25: #{tpu_custom_call.1} parent=11 // pred_check
          %p334 = pneg %p136
        $region26: #{tpu_custom_call.1} parent=11 // pred_check_branch
          %336 = sbr.rel (%p334) target = $region28
        $region27: #{tpu_custom_call.1} parent=11 // pred_region
          _
        $region28: #{tpu_custom_call.1} parent=11 // pred_fallthru
          _
        // Predicated region
        $region29: #{tpu_custom_call.1} parent=11 // pred_check
          %p337 = pneg %p157
        $region30: #{tpu_custom_call.1} parent=11 // pred_check_branch
          %339 = sbr.rel (%p337) target = $region32
        $region31: #{tpu_custom_call.1} parent=11 // pred_region
          %341 = vsyncadd [#allocation9], 0
          %s342 = sshll.u32 %s5, 4
          %s343 = int_to_ptr.hbm [resolvable:$true] %s342
          %s344 = sshll.u32 [#allocation8], 4
          %s345 = int_to_ptr.vmem [resolvable:$true] %s344
          %350 = dma.hbm_to_vmem [thread:$0]  %s343, 1024, %s345, [#allocation9], 64, 64, 4
        $region32: #{tpu_custom_call.1} parent=11 // pred_fallthru
          _
        // Predicated region
        $region33: #{tpu_custom_call.1} parent=11 // pred_check
          %p351 = pneg %p178
        $region34: #{tpu_custom_call.1} parent=11 // pred_check_branch
          %353 = sbr.rel (%p351) target = $region36
        $region35: #{tpu_custom_call.1} parent=11 // pred_region
          _
        $region36: #{tpu_custom_call.1} parent=11 // pred_fallthru
          _
        // Predicated region
        $region37: #{tpu_custom_call.1} parent=11 // pred_check
          %p354 = pneg %p199
        $region38: #{tpu_custom_call.1} parent=11 // pred_check_branch
          %356 = sbr.rel (%p354) target = $region40
        $region39: #{tpu_custom_call.1} parent=11 // pred_region
          %358 = vsyncadd [#allocation9], 0
          %s359 = sshll.u32 %s7, 4
          %s360 = int_to_ptr.hbm [resolvable:$true] %s359
          %s361 = sshll.u32 [#allocation10], 4
          %s362 = int_to_ptr.vmem [resolvable:$true] %s361
          %367 = dma.hbm_to_vmem [thread:$0]  %s360, 1024, %s362, [#allocation9], 64, 64, 4
        $region40: #{tpu_custom_call.1} parent=11 // pred_fallthru
          _
        // Predicated region
        $region41: #{tpu_custom_call.1} parent=11 // pred_check
          %p368 = pneg %p220
        $region42: #{tpu_custom_call.1} parent=11 // pred_check_branch
          %370 = sbr.rel (%p368) target = $region44
        $region43: #{tpu_custom_call.1} parent=11 // pred_region
          _
        $region44: #{tpu_custom_call.1} parent=11 // pred_fallthru
          _
        // Predicated region
        $region45: #{tpu_custom_call.1} parent=11 // pred_check
          %p371 = pneg %p241
        $region46: #{tpu_custom_call.1} parent=11 // pred_check_branch
          %373 = sbr.rel (%p371) target = $region48
        $region47: #{tpu_custom_call.1} parent=11 // pred_region
          %375 = vsyncadd [#allocation12], 0
          %s376 = sshll.u32 %s9, 4
          %s377 = int_to_ptr.hbm [resolvable:$true] %s376
          %s378 = sshll.u32 [#allocation11], 4
          %s379 = int_to_ptr.vmem [resolvable:$true] %s378
          %384 = dma.hbm_to_vmem [thread:$0]  %s377, 1024, %s379, [#allocation12], 64, 64, 4
        $region48: #{tpu_custom_call.1} parent=11 // pred_fallthru
          _
        // Predicated region
        $region49: #{tpu_custom_call.1} parent=11 // pred_check
          %p385 = pneg %p262
        $region50: #{tpu_custom_call.1} parent=11 // pred_check_branch
          %387 = sbr.rel (%p385) target = $region52
        $region51: #{tpu_custom_call.1} parent=11 // pred_region
          _
        $region52: #{tpu_custom_call.1} parent=11 // pred_fallthru
          _
      $region12: #{tpu_custom_call.1} parent=5 // pred_fallthru
        _
      %p388 = scmp.lt.s32.totalorder %s26, 2
      // Predicated region
      $region53: #{tpu_custom_call.1} parent=5 // pred_check
        %p389 = pneg %p388
      $region54: #{tpu_custom_call.1} parent=5 // pred_check_branch
        %391 = sbr.rel (%p389) target = $region56
      $region55: #{tpu_custom_call.1} parent=5 // pred_region
        // Predicated region
        $region57: #{tpu_custom_call.1} parent=55 // pred_check
          %p392 = pneg %p46
        $region58: #{tpu_custom_call.1} parent=55 // pred_check_branch
          %394 = sbr.rel (%p392) target = $region60
        $region59: #{tpu_custom_call.1} parent=55 // pred_region
          %s395 = sand.u32 %s36, 1
          %s396 = scalar_lea.sflag [#allocation3], %s395
          %s397 = sand.u32 %s36, 1
          %s398 = smul.addr %s397, 128
          %s399 = scalar_lea.vmem [#allocation2], %s398
          %s400 = smul.u32 16, %s26
          %402 = vsyncadd %s396, 0
          %s403 = smul.addr %s400, 8
          %s404 = scalar_lea.hbm %s0, %s403
          %s405 = sshll.u32 %s404, 4
          %s406 = int_to_ptr.hbm [resolvable:$true] %s405
          %s407 = sshll.u32 %s399, 4
          %s408 = int_to_ptr.vmem [resolvable:$true] %s407
          %413 = dma.hbm_to_vmem [thread:$0]  %s406, 2048, %s408, %s396, 128, 128, 8
        $region60: #{tpu_custom_call.1} parent=55 // pred_fallthru
          _
      $region56: #{tpu_custom_call.1} parent=5 // pred_fallthru
        _
      %p414 = scmp.le.s32.totalorder 1, %s26
      %p415 = scmp.lt.s32.totalorder %s26, 3
      %p416 = pnand %p414, %p415
      %p417 = pneg %p416
      // Predicated region
      $region61: #{tpu_custom_call.1} parent=5 // pred_check
        _
      $region62: #{tpu_custom_call.1} parent=5 // pred_check_branch
        %419 = sbr.rel (%p416) target = $region64
      $region63: #{tpu_custom_call.1} parent=5 // pred_region
        %s420 = ssub.s32 %s26, 1
        %s421 = sand.u32 %s39, 1
        %s422 = scalar_lea.sflag [#allocation3], %s421
        %s423 = sand.u32 %s39, 1
        %s424 = smul.addr %s423, 128
        %s425 = scalar_lea.vmem [#allocation2], %s424
        // Predicated region
        $region65: #{tpu_custom_call.1} parent=63 // pred_check
          %p426 = pneg %p52
        $region66: #{tpu_custom_call.1} parent=63 // pred_check_branch
          %428 = sbr.rel (%p426) target = $region68
        $region67: #{tpu_custom_call.1} parent=63 // pred_region
          %430 = dma.done %s422, 2048
        $region68: #{tpu_custom_call.1} parent=63 // pred_fallthru
          _
        // Predicated region
        $region69: #{tpu_custom_call.1} parent=63 // pred_check
          %p431 = pneg %p73
        $region70: #{tpu_custom_call.1} parent=63 // pred_check_branch
          %433 = sbr.rel (%p431) target = $region72
        $region71: #{tpu_custom_call.1} parent=63 // pred_region
          %435 = dma.done [#allocation6], 1024
        $region72: #{tpu_custom_call.1} parent=63 // pred_fallthru
          _
        // Predicated region
        $region73: #{tpu_custom_call.1} parent=63 // pred_check
          %p436 = pneg %p115
        $region74: #{tpu_custom_call.1} parent=63 // pred_check_branch
          %438 = sbr.rel (%p436) target = $region76
        $region75: #{tpu_custom_call.1} parent=63 // pred_region
          %440 = dma.done [#allocation6], 1024
        $region76: #{tpu_custom_call.1} parent=63 // pred_fallthru
          _
        // Predicated region
        $region77: #{tpu_custom_call.1} parent=63 // pred_check
          %p441 = pneg %p157
        $region78: #{tpu_custom_call.1} parent=63 // pred_check_branch
          %443 = sbr.rel (%p441) target = $region80
        $region79: #{tpu_custom_call.1} parent=63 // pred_region
          %445 = dma.done [#allocation9], 1024
        $region80: #{tpu_custom_call.1} parent=63 // pred_fallthru
          _
        // Predicated region
        $region81: #{tpu_custom_call.1} parent=63 // pred_check
          %p446 = pneg %p199
        $region82: #{tpu_custom_call.1} parent=63 // pred_check_branch
          %448 = sbr.rel (%p446) target = $region84
        $region83: #{tpu_custom_call.1} parent=63 // pred_region
          %450 = dma.done [#allocation9], 1024
        $region84: #{tpu_custom_call.1} parent=63 // pred_fallthru
          _
        // Predicated region
        $region85: #{tpu_custom_call.1} parent=63 // pred_check
          %p451 = pneg %p241
        $region86: #{tpu_custom_call.1} parent=63 // pred_check_branch
          %453 = sbr.rel (%p451) target = $region88
        $region87: #{tpu_custom_call.1} parent=63 // pred_region
          %455 = dma.done [#allocation12], 1024
        $region88: #{tpu_custom_call.1} parent=63 // pred_fallthru
          _
        %s456 = sand.u32 %s39, 1
        %s457 = scalar_lea.sflag [#allocation3], %s456
        %s458 = sand.u32 %s39, 1
        %s459 = smul.addr %s458, 128
        %s460 = scalar_lea.vmem [#allocation2], %s459
        %p461 = pneg %p52
        %p462 = pneg %p49
        %p463 = pneg %p73
        %p464 = pneg %p70
        %p465 = pneg %p94
        %p466 = pneg %p91
        %p467 = pneg %p115
        %p468 = pneg %p112
        %p469 = pneg %p136
        %p470 = pneg %p133
        %p471 = pneg %p157
        %p472 = pneg %p154
        %p473 = pneg %p178
        %p474 = pneg %p175
        %p475 = pneg %p199
        %p476 = pneg %p196
        %p477 = pneg %p220
        %p478 = pneg %p217
        %p479 = pneg %p241
        %p480 = pneg %p238
        %p481 = pneg %p262
        %p482 = pneg %p259
        %p483 = pneg %p288
        %p484 = pneg %p285
        %s485 = sand.u32 %s275, 1
        %s486 = scalar_lea.sflag [#allocation4], %s485
        %s487 = sand.u32 %s275, 1
        %s488 = smul.addr %s487, 128
        %s489 = scalar_lea.vmem [#allocation13], %s488
        %s490 = smul.u32 16, %s31
        %s491 = smul.u32 16, %s31
        %v492 = vld [vmem:[%s425] sm:$0xff]
        %v493 = vld [vmem:[%s425 + $0x8] sm:$0xff]
        %v494 = vld [vmem:[%s425 + $0x10] sm:$0xff]
        %v495 = vld [vmem:[%s425 + $0x18] sm:$0xff]
        %v496 = vld [vmem:[%s425 + $0x20] sm:$0xff]
        %v497 = vld [vmem:[%s425 + $0x28] sm:$0xff]
        %v498 = vld [vmem:[%s425 + $0x30] sm:$0xff]
        %v499 = vld [vmem:[%s425 + $0x38] sm:$0xff]
        %v500 = vld [vmem:[%s425 + $0x40] sm:$0xff]
        %v501 = vld [vmem:[%s425 + $0x48] sm:$0xff]
        %v502 = vld [vmem:[%s425 + $0x50] sm:$0xff]
        %v503 = vld [vmem:[%s425 + $0x58] sm:$0xff]
        %v504 = vld [vmem:[%s425 + $0x60] sm:$0xff]
        %v505 = vld [vmem:[%s425 + $0x68] sm:$0xff]
        %v506 = vld [vmem:[%s425 + $0x70] sm:$0xff]
        %v507 = vld [vmem:[%s425 + $0x78] sm:$0xff]
        %v508 = vpack.c.bf16 %v493, %v492
        %v509 = vpack.c.bf16 %v495, %v494
        %v510 = vpack.c.bf16 %v497, %v496
        %v511 = vpack.c.bf16 %v499, %v498
        %v512 = vpack.c.bf16 %v501, %v500
        %v513 = vpack.c.bf16 %v503, %v502
        %v514 = vpack.c.bf16 %v505, %v504
        %v515 = vpack.c.bf16 %v507, %v506
        %v516 = vld [vmem:[#allocation5] sm:$0xf]
        %v517 = vld [vmem:[#allocation5 + $0x4] sm:$0xf]
        %v518 = vld [vmem:[#allocation5 + $0x8] sm:$0xf]
        %v519 = vld [vmem:[#allocation5 + $0xc] sm:$0xf]
        %v520 = vld [vmem:[#allocation5 + $0x10] sm:$0xf]
        %v521 = vld [vmem:[#allocation5 + $0x14] sm:$0xf]
        %v522 = vld [vmem:[#allocation5 + $0x18] sm:$0xf]
        %v523 = vld [vmem:[#allocation5 + $0x1c] sm:$0xf]
        %v524 = vld [vmem:[#allocation5 + $0x20] sm:$0xf]
        %v525 = vld [vmem:[#allocation5 + $0x24] sm:$0xf]
        %v526 = vld [vmem:[#allocation5 + $0x28] sm:$0xf]
        %v527 = vld [vmem:[#allocation5 + $0x2c] sm:$0xf]
        %v528 = vld [vmem:[#allocation5 + $0x30] sm:$0xf]
        %v529 = vld [vmem:[#allocation5 + $0x34] sm:$0xf]
        %v530 = vld [vmem:[#allocation5 + $0x38] sm:$0xf]
        %v531 = vld [vmem:[#allocation5 + $0x3c] sm:$0xf]
        %v532 = vld [vmem:[%s2] sm:$0x1]
        %v534 = vperm.slane %v532, 0
        %v552 = vunpack.c.l.b16 %v516
        %v553 = vunpack.c.l.b16 %v517
        %v554 = vunpack.c.l.b16 %v518
        %v555 = vunpack.c.l.b16 %v519
        %v556 = vunpack.c.l.b16 %v520
        %v557 = vunpack.c.l.b16 %v521
        %v558 = vunpack.c.l.b16 %v522
        %v559 = vunpack.c.l.b16 %v523
        %v560 = vunpack.c.l.b16 %v524
        %v561 = vunpack.c.l.b16 %v525
        %v562 = vunpack.c.l.b16 %v526
        %v563 = vunpack.c.l.b16 %v527
        %v564 = vunpack.c.l.b16 %v528
        %v565 = vunpack.c.l.b16 %v529
        %v566 = vunpack.c.l.b16 %v530
        %v567 = vunpack.c.l.b16 %v531
        %v568 = vpack.c.b16 %v553, %v552
        %v569 = vpack.c.b16 %v555, %v554
        %v570 = vpack.c.b16 %v557, %v556
        %v571 = vpack.c.b16 %v559, %v558
        %v572 = vpack.c.b16 %v561, %v560
        %v573 = vpack.c.b16 %v563, %v562
        %v574 = vpack.c.b16 %v565, %v564
        %v575 = vpack.c.b16 %v567, %v566
        %584 = vmatpush.bf16.msra.mxu0 %v575
        %585 = vmatpush.bf16.msra.mxu0 %v574
        %586 = vmatpush.bf16.msra.mxu0 %v573
        %587 = vmatpush.bf16.msra.mxu0 %v572
        %588 = vmatpush.bf16.msra.mxu0 %v571
        %589 = vmatpush.bf16.msra.mxu0 %v570
        %590 = vmatpush.bf16.msra.mxu0 %v569
        %591 = vmatpush.bf16.msra.mxu0 %v568
        %592 = vmatmul.bf16.gmra.mxu0 %v508
        %v593 = vpop.f32.mrf.mxu0
        %v594 = vadd.f32 %v534, %v593
        %v595 = vpop.f32.mrf.mxu0
        %v596 = vadd.f32 %v534, %v595
        %597 = vmatmul.bf16.gmra.mxu0 %v509
        %v598 = vpop.f32.mrf.mxu0
        %v599 = vadd.f32 %v534, %v598
        %v600 = vpop.f32.mrf.mxu0
        %v601 = vadd.f32 %v534, %v600
        %602 = vmatmul.bf16.gmra.mxu0 %v510
        %v603 = vpop.f32.mrf.mxu0
        %v604 = vadd.f32 %v534, %v603
        %v605 = vpop.f32.mrf.mxu0
        %v606 = vadd.f32 %v534, %v605
        %607 = vmatmul.bf16.gmra.mxu0 %v511
        %v608 = vpop.f32.mrf.mxu0
        %v609 = vadd.f32 %v534, %v608
        %v610 = vpop.f32.mrf.mxu0
        %v611 = vadd.f32 %v534, %v610
        %612 = vmatmul.bf16.gmra.mxu0 %v512
        %v613 = vpop.f32.mrf.mxu0
        %v614 = vadd.f32 %v534, %v613
        %v615 = vpop.f32.mrf.mxu0
        %v616 = vadd.f32 %v534, %v615
        %617 = vmatmul.bf16.gmra.mxu0 %v513
        %v618 = vpop.f32.mrf.mxu0
        %v619 = vadd.f32 %v534, %v618
        %v620 = vpop.f32.mrf.mxu0
        %v621 = vadd.f32 %v534, %v620
        %622 = vmatmul.bf16.gmra.mxu0 %v514
        %v623 = vpop.f32.mrf.mxu0
        %v624 = vadd.f32 %v534, %v623
        %v625 = vpop.f32.mrf.mxu0
        %v626 = vadd.f32 %v534, %v625
        %627 = vmatmul.bf16.gmra.mxu0 %v515
        %v628 = vpop.f32.mrf.mxu0
        %v629 = vadd.f32 %v534, %v628
        %v630 = vpop.f32.mrf.mxu0
        %v631 = vadd.f32 %v534, %v630
        %632 = vdwg.mxu0
        %v633 = vmax.f32 %v594, 0.0
        %v634 = vmax.f32 %v596, 0.0
        %v635 = vmax.f32 %v599, 0.0
        %v636 = vmax.f32 %v601, 0.0
        %v637 = vmax.f32 %v604, 0.0
        %v638 = vmax.f32 %v606, 0.0
        %v639 = vmax.f32 %v609, 0.0
        %v640 = vmax.f32 %v611, 0.0
        %v641 = vmax.f32 %v614, 0.0
        %v642 = vmax.f32 %v616, 0.0
        %v643 = vmax.f32 %v619, 0.0
        %v644 = vmax.f32 %v621, 0.0
        %v645 = vmax.f32 %v624, 0.0
        %v646 = vmax.f32 %v626, 0.0
        %v647 = vmax.f32 %v629, 0.0
        %v648 = vmax.f32 %v631, 0.0
        %v649 = vpack.c.bf16 %v634, %v633
        %v650 = vpack.c.bf16 %v636, %v635
        %v651 = vpack.c.bf16 %v638, %v637
        %v652 = vpack.c.bf16 %v640, %v639
        %v653 = vpack.c.bf16 %v642, %v641
        %v654 = vpack.c.bf16 %v644, %v643
        %v655 = vpack.c.bf16 %v646, %v645
        %v656 = vpack.c.bf16 %v648, %v647
        %v657 = vld [vmem:[#allocation7] sm:$0xf]
        %v658 = vld [vmem:[#allocation7 + $0x4] sm:$0xf]
        %v659 = vld [vmem:[#allocation7 + $0x8] sm:$0xf]
        %v660 = vld [vmem:[#allocation7 + $0xc] sm:$0xf]
        %v661 = vld [vmem:[#allocation7 + $0x10] sm:$0xf]
        %v662 = vld [vmem:[#allocation7 + $0x14] sm:$0xf]
        %v663 = vld [vmem:[#allocation7 + $0x18] sm:$0xf]
        %v664 = vld [vmem:[#allocation7 + $0x1c] sm:$0xf]
        %v665 = vld [vmem:[#allocation7 + $0x20] sm:$0xf]
        %v666 = vld [vmem:[#allocation7 + $0x24] sm:$0xf]
        %v667 = vld [vmem:[#allocation7 + $0x28] sm:$0xf]
        %v668 = vld [vmem:[#allocation7 + $0x2c] sm:$0xf]
        %v669 = vld [vmem:[#allocation7 + $0x30] sm:$0xf]
        %v670 = vld [vmem:[#allocation7 + $0x34] sm:$0xf]
        %v671 = vld [vmem:[#allocation7 + $0x38] sm:$0xf]
        %v672 = vld [vmem:[#allocation7 + $0x3c] sm:$0xf]
        %v673 = vld [vmem:[%s4] sm:$0x1]
        %v675 = vperm.slane %v673, 0
        %v693 = vunpack.c.l.b16 %v657
        %v694 = vunpack.c.l.b16 %v658
        %v695 = vunpack.c.l.b16 %v659
        %v696 = vunpack.c.l.b16 %v660
        %v697 = vunpack.c.l.b16 %v661
        %v698 = vunpack.c.l.b16 %v662
        %v699 = vunpack.c.l.b16 %v663
        %v700 = vunpack.c.l.b16 %v664
        %v701 = vunpack.c.l.b16 %v665
        %v702 = vunpack.c.l.b16 %v666
        %v703 = vunpack.c.l.b16 %v667
        %v704 = vunpack.c.l.b16 %v668
        %v705 = vunpack.c.l.b16 %v669
        %v706 = vunpack.c.l.b16 %v670
        %v707 = vunpack.c.l.b16 %v671
        %v708 = vunpack.c.l.b16 %v672
        %v709 = vpack.c.b16 %v694, %v693
        %v710 = vpack.c.b16 %v696, %v695
        %v711 = vpack.c.b16 %v698, %v697
        %v712 = vpack.c.b16 %v700, %v699
        %v713 = vpack.c.b16 %v702, %v701
        %v714 = vpack.c.b16 %v704, %v703
        %v715 = vpack.c.b16 %v706, %v705
        %v716 = vpack.c.b16 %v708, %v707
        %725 = vmatpush.bf16.msra.mxu0 %v716
        %726 = vmatpush.bf16.msra.mxu0 %v715
        %727 = vmatpush.bf16.msra.mxu0 %v714
        %728 = vmatpush.bf16.msra.mxu0 %v713
        %729 = vmatpush.bf16.msra.mxu0 %v712
        %730 = vmatpush.bf16.msra.mxu0 %v711
        %731 = vmatpush.bf16.msra.mxu0 %v710
        %732 = vmatpush.bf16.msra.mxu0 %v709
        %733 = vmatmul.bf16.gmra.mxu0 %v649
        %v734 = vpop.f32.mrf.mxu0
        %v735 = vadd.f32 %v675, %v734
        %v736 = vpop.f32.mrf.mxu0
        %v737 = vadd.f32 %v675, %v736
        %738 = vmatmul.bf16.gmra.mxu0 %v650
        %v739 = vpop.f32.mrf.mxu0
        %v740 = vadd.f32 %v675, %v739
        %v741 = vpop.f32.mrf.mxu0
        %v742 = vadd.f32 %v675, %v741
        %743 = vmatmul.bf16.gmra.mxu0 %v651
        %v744 = vpop.f32.mrf.mxu0
        %v745 = vadd.f32 %v675, %v744
        %v746 = vpop.f32.mrf.mxu0
        %v747 = vadd.f32 %v675, %v746
        %748 = vmatmul.bf16.gmra.mxu0 %v652
        %v749 = vpop.f32.mrf.mxu0
        %v750 = vadd.f32 %v675, %v749
        %v751 = vpop.f32.mrf.mxu0
        %v752 = vadd.f32 %v675, %v751
        %753 = vmatmul.bf16.gmra.mxu0 %v653
        %v754 = vpop.f32.mrf.mxu0
        %v755 = vadd.f32 %v675, %v754
        %v756 = vpop.f32.mrf.mxu0
        %v757 = vadd.f32 %v675, %v756
        %758 = vmatmul.bf16.gmra.mxu0 %v654
        %v759 = vpop.f32.mrf.mxu0
        %v760 = vadd.f32 %v675, %v759
        %v761 = vpop.f32.mrf.mxu0
        %v762 = vadd.f32 %v675, %v761
        %763 = vmatmul.bf16.gmra.mxu0 %v655
        %v764 = vpop.f32.mrf.mxu0
        %v765 = vadd.f32 %v675, %v764
        %v766 = vpop.f32.mrf.mxu0
        %v767 = vadd.f32 %v675, %v766
        %768 = vmatmul.bf16.gmra.mxu0 %v656
        %v769 = vpop.f32.mrf.mxu0
        %v770 = vadd.f32 %v675, %v769
        %v771 = vpop.f32.mrf.mxu0
        %v772 = vadd.f32 %v675, %v771
        %773 = vdwg.mxu0
        %v774 = vmax.f32 %v735, 0.0
        %v775 = vmax.f32 %v737, 0.0
        %v776 = vmax.f32 %v740, 0.0
        %v777 = vmax.f32 %v742, 0.0
        %v778 = vmax.f32 %v745, 0.0
        %v779 = vmax.f32 %v747, 0.0
        %v780 = vmax.f32 %v750, 0.0
        %v781 = vmax.f32 %v752, 0.0
        %v782 = vmax.f32 %v755, 0.0
        %v783 = vmax.f32 %v757, 0.0
        %v784 = vmax.f32 %v760, 0.0
        %v785 = vmax.f32 %v762, 0.0
        %v786 = vmax.f32 %v765, 0.0
        %v787 = vmax.f32 %v767, 0.0
        %v788 = vmax.f32 %v770, 0.0
        %v789 = vmax.f32 %v772, 0.0
        %v790 = vpack.c.bf16 %v775, %v774
        %v791 = vpack.c.bf16 %v777, %v776
        %v792 = vpack.c.bf16 %v779, %v778
        %v793 = vpack.c.bf16 %v781, %v780
        %v794 = vpack.c.bf16 %v783, %v782
        %v795 = vpack.c.bf16 %v785, %v784
        %v796 = vpack.c.bf16 %v787, %v786
        %v797 = vpack.c.bf16 %v789, %v788
        %v798 = vld [vmem:[#allocation8] sm:$0xf]
        %v799 = vld [vmem:[#allocation8 + $0x4] sm:$0xf]
        %v800 = vld [vmem:[#allocation8 + $0x8] sm:$0xf]
        %v801 = vld [vmem:[#allocation8 + $0xc] sm:$0xf]
        %v802 = vld [vmem:[#allocation8 + $0x10] sm:$0xf]
        %v803 = vld [vmem:[#allocation8 + $0x14] sm:$0xf]
        %v804 = vld [vmem:[#allocation8 + $0x18] sm:$0xf]
        %v805 = vld [vmem:[#allocation8 + $0x1c] sm:$0xf]
        %v806 = vld [vmem:[#allocation8 + $0x20] sm:$0xf]
        %v807 = vld [vmem:[#allocation8 + $0x24] sm:$0xf]
        %v808 = vld [vmem:[#allocation8 + $0x28] sm:$0xf]
        %v809 = vld [vmem:[#allocation8 + $0x2c] sm:$0xf]
        %v810 = vld [vmem:[#allocation8 + $0x30] sm:$0xf]
        %v811 = vld [vmem:[#allocation8 + $0x34] sm:$0xf]
        %v812 = vld [vmem:[#allocation8 + $0x38] sm:$0xf]
        %v813 = vld [vmem:[#allocation8 + $0x3c] sm:$0xf]
        %v814 = vld [vmem:[%s6] sm:$0x1]
        %v816 = vperm.slane %v814, 0
        %v834 = vunpack.c.l.b16 %v798
        %v835 = vunpack.c.l.b16 %v799
        %v836 = vunpack.c.l.b16 %v800
        %v837 = vunpack.c.l.b16 %v801
        %v838 = vunpack.c.l.b16 %v802
        %v839 = vunpack.c.l.b16 %v803
        %v840 = vunpack.c.l.b16 %v804
        %v841 = vunpack.c.l.b16 %v805
        %v842 = vunpack.c.l.b16 %v806
        %v843 = vunpack.c.l.b16 %v807
        %v844 = vunpack.c.l.b16 %v808
        %v845 = vunpack.c.l.b16 %v809
        %v846 = vunpack.c.l.b16 %v810
        %v847 = vunpack.c.l.b16 %v811
        %v848 = vunpack.c.l.b16 %v812
        %v849 = vunpack.c.l.b16 %v813
        %v850 = vpack.c.b16 %v835, %v834
        %v851 = vpack.c.b16 %v837, %v836
        %v852 = vpack.c.b16 %v839, %v838
        %v853 = vpack.c.b16 %v841, %v840
        %v854 = vpack.c.b16 %v843, %v842
        %v855 = vpack.c.b16 %v845, %v844
        %v856 = vpack.c.b16 %v847, %v846
        %v857 = vpack.c.b16 %v849, %v848
        %866 = vmatpush.bf16.msra.mxu0 %v857
        %867 = vmatpush.bf16.msra.mxu0 %v856
        %868 = vmatpush.bf16.msra.mxu0 %v855
        %869 = vmatpush.bf16.msra.mxu0 %v854
        %870 = vmatpush.bf16.msra.mxu0 %v853
        %871 = vmatpush.bf16.msra.mxu0 %v852
        %872 = vmatpush.bf16.msra.mxu0 %v851
        %873 = vmatpush.bf16.msra.mxu0 %v850
        %874 = vmatmul.bf16.gmra.mxu0 %v790
        %v875 = vpop.f32.mrf.mxu0
        %v876 = vadd.f32 %v816, %v875
        %v877 = vpop.f32.mrf.mxu0
        %v878 = vadd.f32 %v816, %v877
        %879 = vmatmul.bf16.gmra.mxu0 %v791
        %v880 = vpop.f32.mrf.mxu0
        %v881 = vadd.f32 %v816, %v880
        %v882 = vpop.f32.mrf.mxu0
        %v883 = vadd.f32 %v816, %v882
        %884 = vmatmul.bf16.gmra.mxu0 %v792
        %v885 = vpop.f32.mrf.mxu0
        %v886 = vadd.f32 %v816, %v885
        %v887 = vpop.f32.mrf.mxu0
        %v888 = vadd.f32 %v816, %v887
        %889 = vmatmul.bf16.gmra.mxu0 %v793
        %v890 = vpop.f32.mrf.mxu0
        %v891 = vadd.f32 %v816, %v890
        %v892 = vpop.f32.mrf.mxu0
        %v893 = vadd.f32 %v816, %v892
        %894 = vmatmul.bf16.gmra.mxu0 %v794
        %v895 = vpop.f32.mrf.mxu0
        %v896 = vadd.f32 %v816, %v895
        %v897 = vpop.f32.mrf.mxu0
        %v898 = vadd.f32 %v816, %v897
        %899 = vmatmul.bf16.gmra.mxu0 %v795
        %v900 = vpop.f32.mrf.mxu0
        %v901 = vadd.f32 %v816, %v900
        %v902 = vpop.f32.mrf.mxu0
        %v903 = vadd.f32 %v816, %v902
        %904 = vmatmul.bf16.gmra.mxu0 %v796
        %v905 = vpop.f32.mrf.mxu0
        %v906 = vadd.f32 %v816, %v905
        %v907 = vpop.f32.mrf.mxu0
        %v908 = vadd.f32 %v816, %v907
        %909 = vmatmul.bf16.gmra.mxu0 %v797
        %v910 = vpop.f32.mrf.mxu0
        %v911 = vadd.f32 %v816, %v910
        %v912 = vpop.f32.mrf.mxu0
        %v913 = vadd.f32 %v816, %v912
        %914 = vdwg.mxu0
        %v915 = vmax.f32 %v876, 0.0
        %v916 = vmax.f32 %v878, 0.0
        %v917 = vmax.f32 %v881, 0.0
        %v918 = vmax.f32 %v883, 0.0
        %v919 = vmax.f32 %v886, 0.0
        %v920 = vmax.f32 %v888, 0.0
        %v921 = vmax.f32 %v891, 0.0
        %v922 = vmax.f32 %v893, 0.0
        %v923 = vmax.f32 %v896, 0.0
        %v924 = vmax.f32 %v898, 0.0
        %v925 = vmax.f32 %v901, 0.0
        %v926 = vmax.f32 %v903, 0.0
        %v927 = vmax.f32 %v906, 0.0
        %v928 = vmax.f32 %v908, 0.0
        %v929 = vmax.f32 %v911, 0.0
        %v930 = vmax.f32 %v913, 0.0
        %v931 = vpack.c.bf16 %v916, %v915
        %v932 = vpack.c.bf16 %v918, %v917
        %v933 = vpack.c.bf16 %v920, %v919
        %v934 = vpack.c.bf16 %v922, %v921
        %v935 = vpack.c.bf16 %v924, %v923
        %v936 = vpack.c.bf16 %v926, %v925
        %v937 = vpack.c.bf16 %v928, %v927
        %v938 = vpack.c.bf16 %v930, %v929
        %v939 = vld [vmem:[#allocation10] sm:$0xf]
        %v940 = vld [vmem:[#allocation10 + $0x4] sm:$0xf]
        %v941 = vld [vmem:[#allocation10 + $0x8] sm:$0xf]
        %v942 = vld [vmem:[#allocation10 + $0xc] sm:$0xf]
        %v943 = vld [vmem:[#allocation10 + $0x10] sm:$0xf]
        %v944 = vld [vmem:[#allocation10 + $0x14] sm:$0xf]
        %v945 = vld [vmem:[#allocation10 + $0x18] sm:$0xf]
        %v946 = vld [vmem:[#allocation10 + $0x1c] sm:$0xf]
        %v947 = vld [vmem:[#allocation10 + $0x20] sm:$0xf]
        %v948 = vld [vmem:[#allocation10 + $0x24] sm:$0xf]
        %v949 = vld [vmem:[#allocation10 + $0x28] sm:$0xf]
        %v950 = vld [vmem:[#allocation10 + $0x2c] sm:$0xf]
        %v951 = vld [vmem:[#allocation10 + $0x30] sm:$0xf]
        %v952 = vld [vmem:[#allocation10 + $0x34] sm:$0xf]
        %v953 = vld [vmem:[#allocation10 + $0x38] sm:$0xf]
        %v954 = vld [vmem:[#allocation10 + $0x3c] sm:$0xf]
        %v955 = vld [vmem:[%s8] sm:$0x1]
        %v957 = vperm.slane %v955, 0
        %v975 = vunpack.c.l.b16 %v939
        %v976 = vunpack.c.l.b16 %v940
        %v977 = vunpack.c.l.b16 %v941
        %v978 = vunpack.c.l.b16 %v942
        %v979 = vunpack.c.l.b16 %v943
        %v980 = vunpack.c.l.b16 %v944
        %v981 = vunpack.c.l.b16 %v945
        %v982 = vunpack.c.l.b16 %v946
        %v983 = vunpack.c.l.b16 %v947
        %v984 = vunpack.c.l.b16 %v948
        %v985 = vunpack.c.l.b16 %v949
        %v986 = vunpack.c.l.b16 %v950
        %v987 = vunpack.c.l.b16 %v951
        %v988 = vunpack.c.l.b16 %v952
        %v989 = vunpack.c.l.b16 %v953
        %v990 = vunpack.c.l.b16 %v954
        %v991 = vpack.c.b16 %v976, %v975
        %v992 = vpack.c.b16 %v978, %v977
        %v993 = vpack.c.b16 %v980, %v979
        %v994 = vpack.c.b16 %v982, %v981
        %v995 = vpack.c.b16 %v984, %v983
        %v996 = vpack.c.b16 %v986, %v985
        %v997 = vpack.c.b16 %v988, %v987
        %v998 = vpack.c.b16 %v990, %v989
        %1007 = vmatpush.bf16.msra.mxu0 %v998
        %1008 = vmatpush.bf16.msra.mxu0 %v997
        %1009 = vmatpush.bf16.msra.mxu0 %v996
        %1010 = vmatpush.bf16.msra.mxu0 %v995
        %1011 = vmatpush.bf16.msra.mxu0 %v994
        %1012 = vmatpush.bf16.msra.mxu0 %v993
        %1013 = vmatpush.bf16.msra.mxu0 %v992
        %1014 = vmatpush.bf16.msra.mxu0 %v991
        %1015 = vmatmul.bf16.gmra.mxu0 %v931
        %v1016 = vpop.f32.mrf.mxu0
        %v1017 = vadd.f32 %v957, %v1016
        %v1018 = vpop.f32.mrf.mxu0
        %v1019 = vadd.f32 %v957, %v1018
        %1020 = vmatmul.bf16.gmra.mxu0 %v932
        %v1021 = vpop.f32.mrf.mxu0
        %v1022 = vadd.f32 %v957, %v1021
        %v1023 = vpop.f32.mrf.mxu0
        %v1024 = vadd.f32 %v957, %v1023
        %1025 = vmatmul.bf16.gmra.mxu0 %v933
        %v1026 = vpop.f32.mrf.mxu0
        %v1027 = vadd.f32 %v957, %v1026
        %v1028 = vpop.f32.mrf.mxu0
        %v1029 = vadd.f32 %v957, %v1028
        %1030 = vmatmul.bf16.gmra.mxu0 %v934
        %v1031 = vpop.f32.mrf.mxu0
        %v1032 = vadd.f32 %v957, %v1031
        %v1033 = vpop.f32.mrf.mxu0
        %v1034 = vadd.f32 %v957, %v1033
        %1035 = vmatmul.bf16.gmra.mxu0 %v935
        %v1036 = vpop.f32.mrf.mxu0
        %v1037 = vadd.f32 %v957, %v1036
        %v1038 = vpop.f32.mrf.mxu0
        %v1039 = vadd.f32 %v957, %v1038
        %1040 = vmatmul.bf16.gmra.mxu0 %v936
        %v1041 = vpop.f32.mrf.mxu0
        %v1042 = vadd.f32 %v957, %v1041
        %v1043 = vpop.f32.mrf.mxu0
        %v1044 = vadd.f32 %v957, %v1043
        %1045 = vmatmul.bf16.gmra.mxu0 %v937
        %v1046 = vpop.f32.mrf.mxu0
        %v1047 = vadd.f32 %v957, %v1046
        %v1048 = vpop.f32.mrf.mxu0
        %v1049 = vadd.f32 %v957, %v1048
        %1050 = vmatmul.bf16.gmra.mxu0 %v938
        %v1051 = vpop.f32.mrf.mxu0
        %v1052 = vadd.f32 %v957, %v1051
        %v1053 = vpop.f32.mrf.mxu0
        %v1054 = vadd.f32 %v957, %v1053
        %1055 = vdwg.mxu0
        %v1056 = vmax.f32 %v1017, 0.0
        %v1057 = vmax.f32 %v1019, 0.0
        %v1058 = vmax.f32 %v1022, 0.0
        %v1059 = vmax.f32 %v1024, 0.0
        %v1060 = vmax.f32 %v1027, 0.0
        %v1061 = vmax.f32 %v1029, 0.0
        %v1062 = vmax.f32 %v1032, 0.0
        %v1063 = vmax.f32 %v1034, 0.0
        %v1064 = vmax.f32 %v1037, 0.0
        %v1065 = vmax.f32 %v1039, 0.0
        %v1066 = vmax.f32 %v1042, 0.0
        %v1067 = vmax.f32 %v1044, 0.0
        %v1068 = vmax.f32 %v1047, 0.0
        %v1069 = vmax.f32 %v1049, 0.0
        %v1070 = vmax.f32 %v1052, 0.0
        %v1071 = vmax.f32 %v1054, 0.0
        %v1072 = vpack.c.bf16 %v1057, %v1056
        %v1073 = vpack.c.bf16 %v1059, %v1058
        %v1074 = vpack.c.bf16 %v1061, %v1060
        %v1075 = vpack.c.bf16 %v1063, %v1062
        %v1076 = vpack.c.bf16 %v1065, %v1064
        %v1077 = vpack.c.bf16 %v1067, %v1066
        %v1078 = vpack.c.bf16 %v1069, %v1068
        %v1079 = vpack.c.bf16 %v1071, %v1070
        %v1080 = vld [vmem:[#allocation11] sm:$0xf]
        %v1081 = vld [vmem:[#allocation11 + $0x4] sm:$0xf]
        %v1082 = vld [vmem:[#allocation11 + $0x8] sm:$0xf]
        %v1083 = vld [vmem:[#allocation11 + $0xc] sm:$0xf]
        %v1084 = vld [vmem:[#allocation11 + $0x10] sm:$0xf]
        %v1085 = vld [vmem:[#allocation11 + $0x14] sm:$0xf]
        %v1086 = vld [vmem:[#allocation11 + $0x18] sm:$0xf]
        %v1087 = vld [vmem:[#allocation11 + $0x1c] sm:$0xf]
        %v1088 = vld [vmem:[#allocation11 + $0x20] sm:$0xf]
        %v1089 = vld [vmem:[#allocation11 + $0x24] sm:$0xf]
        %v1090 = vld [vmem:[#allocation11 + $0x28] sm:$0xf]
        %v1091 = vld [vmem:[#allocation11 + $0x2c] sm:$0xf]
        %v1092 = vld [vmem:[#allocation11 + $0x30] sm:$0xf]
        %v1093 = vld [vmem:[#allocation11 + $0x34] sm:$0xf]
        %v1094 = vld [vmem:[#allocation11 + $0x38] sm:$0xf]
        %v1095 = vld [vmem:[#allocation11 + $0x3c] sm:$0xf]
        %v1096 = vld [vmem:[%s10] sm:$0x1]
        %v1098 = vperm.slane %v1096, 0
        %v1116 = vunpack.c.l.b16 %v1080
        %v1117 = vunpack.c.l.b16 %v1081
        %v1118 = vunpack.c.l.b16 %v1082
        %v1119 = vunpack.c.l.b16 %v1083
        %v1120 = vunpack.c.l.b16 %v1084
        %v1121 = vunpack.c.l.b16 %v1085
        %v1122 = vunpack.c.l.b16 %v1086
        %v1123 = vunpack.c.l.b16 %v1087
        %v1124 = vunpack.c.l.b16 %v1088
        %v1125 = vunpack.c.l.b16 %v1089
        %v1126 = vunpack.c.l.b16 %v1090
        %v1127 = vunpack.c.l.b16 %v1091
        %v1128 = vunpack.c.l.b16 %v1092
        %v1129 = vunpack.c.l.b16 %v1093
        %v1130 = vunpack.c.l.b16 %v1094
        %v1131 = vunpack.c.l.b16 %v1095
        %v1132 = vpack.c.b16 %v1117, %v1116
        %v1133 = vpack.c.b16 %v1119, %v1118
        %v1134 = vpack.c.b16 %v1121, %v1120
        %v1135 = vpack.c.b16 %v1123, %v1122
        %v1136 = vpack.c.b16 %v1125, %v1124
        %v1137 = vpack.c.b16 %v1127, %v1126
        %v1138 = vpack.c.b16 %v1129, %v1128
        %v1139 = vpack.c.b16 %v1131, %v1130
        %1148 = vmatpush.bf16.msra.mxu0 %v1139
        %1149 = vmatpush.bf16.msra.mxu0 %v1138
        %1150 = vmatpush.bf16.msra.mxu0 %v1137
        %1151 = vmatpush.bf16.msra.mxu0 %v1136
        %1152 = vmatpush.bf16.msra.mxu0 %v1135
        %1153 = vmatpush.bf16.msra.mxu0 %v1134
        %1154 = vmatpush.bf16.msra.mxu0 %v1133
        %1155 = vmatpush.bf16.msra.mxu0 %v1132
        %1156 = vmatmul.bf16.gmra.mxu0 %v1072
        %v1157 = vpop.f32.mrf.mxu0
        %v1158 = vadd.f32 %v1098, %v1157
        %v1159 = vpop.f32.mrf.mxu0
        %v1160 = vadd.f32 %v1098, %v1159
        %1161 = vmatmul.bf16.gmra.mxu0 %v1073
        %v1162 = vpop.f32.mrf.mxu0
        %v1163 = vadd.f32 %v1098, %v1162
        %v1164 = vpop.f32.mrf.mxu0
        %v1165 = vadd.f32 %v1098, %v1164
        %1166 = vmatmul.bf16.gmra.mxu0 %v1074
        %v1167 = vpop.f32.mrf.mxu0
        %v1168 = vadd.f32 %v1098, %v1167
        %v1169 = vpop.f32.mrf.mxu0
        %v1170 = vadd.f32 %v1098, %v1169
        %1171 = vmatmul.bf16.gmra.mxu0 %v1075
        %v1172 = vpop.f32.mrf.mxu0
        %v1173 = vadd.f32 %v1098, %v1172
        %v1174 = vpop.f32.mrf.mxu0
        %v1175 = vadd.f32 %v1098, %v1174
        %1176 = vmatmul.bf16.gmra.mxu0 %v1076
        %v1177 = vpop.f32.mrf.mxu0
        %v1178 = vadd.f32 %v1098, %v1177
        %v1179 = vpop.f32.mrf.mxu0
        %v1180 = vadd.f32 %v1098, %v1179
        %1181 = vmatmul.bf16.gmra.mxu0 %v1077
        %v1182 = vpop.f32.mrf.mxu0
        %v1183 = vadd.f32 %v1098, %v1182
        %v1184 = vpop.f32.mrf.mxu0
        %v1185 = vadd.f32 %v1098, %v1184
        %1186 = vmatmul.bf16.gmra.mxu0 %v1078
        %v1187 = vpop.f32.mrf.mxu0
        %v1188 = vadd.f32 %v1098, %v1187
        %v1189 = vpop.f32.mrf.mxu0
        %v1190 = vadd.f32 %v1098, %v1189
        %1191 = vmatmul.bf16.gmra.mxu0 %v1079
        %v1192 = vpop.f32.mrf.mxu0
        %v1193 = vadd.f32 %v1098, %v1192
        %v1194 = vpop.f32.mrf.mxu0
        %v1195 = vadd.f32 %v1098, %v1194
        %1196 = vdwg.mxu0
        %1197 = vst [vmem:[%s489] sm:$0xff] %v1158
        %1198 = vst [vmem:[%s489 + $0x8] sm:$0xff] %v1160
        %1199 = vst [vmem:[%s489 + $0x10] sm:$0xff] %v1163
        %1200 = vst [vmem:[%s489 + $0x18] sm:$0xff] %v1165
        %1201 = vst [vmem:[%s489 + $0x20] sm:$0xff] %v1168
        %1202 = vst [vmem:[%s489 + $0x28] sm:$0xff] %v1170
        %1203 = vst [vmem:[%s489 + $0x30] sm:$0xff] %v1173
        %1204 = vst [vmem:[%s489 + $0x38] sm:$0xff] %v1175
        %1205 = vst [vmem:[%s489 + $0x40] sm:$0xff] %v1178
        %1206 = vst [vmem:[%s489 + $0x48] sm:$0xff] %v1180
        %1207 = vst [vmem:[%s489 + $0x50] sm:$0xff] %v1183
        %1208 = vst [vmem:[%s489 + $0x58] sm:$0xff] %v1185
        %1209 = vst [vmem:[%s489 + $0x60] sm:$0xff] %v1188
        %1210 = vst [vmem:[%s489 + $0x68] sm:$0xff] %v1190
        %1211 = vst [vmem:[%s489 + $0x70] sm:$0xff] %v1193
        %1212 = vst [vmem:[%s489 + $0x78] sm:$0xff] %v1195
        %s1213 = sand.u32 %s275, 1
        %s1214 = scalar_lea.sflag [#allocation4], %s1213
        %s1215 = sand.u32 %s275, 1
        %s1216 = smul.addr %s1215, 128
        %s1217 = scalar_lea.vmem [#allocation13], %s1216
        // Predicated region
        $region89: #{tpu_custom_call.1} parent=63 // pred_check
          %p1218 = pneg %p285
        $region90: #{tpu_custom_call.1} parent=63 // pred_check_branch
          %1220 = sbr.rel (%p1218) target = $region92
        $region91: #{tpu_custom_call.1} parent=63 // pred_region
          %s1221 = smul.u32 16, %s31
          %1223 = vsyncadd %s1214, 0
          %s1224 = smul.addr %s1221, 8
          %s1225 = scalar_lea.hbm %s11, %s1224
          %s1226 = sshll.u32 %s1217, 4
          %s1227 = int_to_ptr.vmem [resolvable:$true] %s1226
          %s1228 = sshll.u32 %s1225, 4
          %s1229 = int_to_ptr.hbm [resolvable:$true] %s1228
          %1234 = dma.vmem_to_hbm [thread:$0]  %s1227, 2048, %s1229, %s1214, 128, 128, 8
        $region92: #{tpu_custom_call.1} parent=63 // pred_fallthru
          _
      $region64: #{tpu_custom_call.1} parent=5 // pred_fallthru
        _
      %p1235 = scmp.le.s32.totalorder 2, %s26
      // Predicated region
      $region93: #{tpu_custom_call.1} parent=5 // pred_check
        %p1236 = pneg %p1235
      $region94: #{tpu_custom_call.1} parent=5 // pred_check_branch
        %1238 = sbr.rel (%p1236) target = $region96
      $region95: #{tpu_custom_call.1} parent=5 // pred_region
        %s1239 = ssub.s32 %s26, 2
        // Predicated region
        $region97: #{tpu_custom_call.1} parent=95 // pred_check
          %p1240 = pneg %p291
        $region98: #{tpu_custom_call.1} parent=95 // pred_check_branch
          %1242 = sbr.rel (%p1240) target = $region100
        $region99: #{tpu_custom_call.1} parent=95 // pred_region
          %s1243 = sand.u32 %s276, 1
          %s1244 = scalar_lea.sflag [#allocation4], %s1243
          %s1245 = sand.u32 %s276, 1
          %s1246 = smul.addr %s1245, 128
          %s1247 = scalar_lea.vmem [#allocation13], %s1246
          %1249 = dma.done %s1244, 2048
        $region100: #{tpu_custom_call.1} parent=95 // pred_fallthru
          _
      $region96: #{tpu_custom_call.1} parent=5 // pred_fallthru
        _
    $region6: #{tpu_custom_call.1} parent=1 // loop_footer
      %s30 = sadd.s32 1, %s26
    $region7: #{tpu_custom_call.1} parent=1 // loop_footer_branch
      %25 = sbr.rel target = $region3
    $region8: #{tpu_custom_call.1} parent=1 // loop_exit
      _
    %1250 = vsyncpa [#allocation3], 1
    %s1251 = scalar_lea.sflag [#allocation3], 1
    %1252 = vsyncpa %s1251, 1
    %1253 = vsyncpa [#allocation6], 1
    %1254 = vsyncpa [#allocation9], 1
    %1255 = vsyncpa [#allocation12], 1
    %1256 = vsyncpa [#allocation4], 1
    %s1257 = scalar_lea.sflag [#allocation4], 1
    %1258 = vsyncpa %s1257, 1

</llo_original>
